<compile_context>
chip_gen: v5e
topology: v5e:2x2
jax: 0.10.0
libtpu: 0.0.40
codegen_flags: <defaults>
</compile_context>

<pallas_src>
import functools

import jax
import jax.numpy as jnp
from jax import lax
from jax.experimental import pallas as pl
from jax.experimental.pallas import tpu as pltpu


def _hinge_repulsion_kernel(rows_ref, cols_ref, loss_ref, acc_ref, *, hinge):
    g = pl.program_id(0)
    i = pl.program_id(1)
    tile_r = rows_ref.shape[0]
    s = cols_ref.shape[0]
    d = cols_ref.shape[1]

    @pl.when((g == 0) & (i == 0))
    def _():
        acc_ref[...] = jnp.zeros_like(acc_ref)

    rows = rows_ref[...].astype(jnp.float32)                         # (TILE_R, D)
    cols = cols_ref[...].astype(jnp.float32)                         # (S, D)

    # Squared pairwise distances via one MXU matmul:
    #   d2[i, j] = ||r_i||^2 + ||c_j||^2 - 2 r_i . c_j
    prod = lax.dot_general(rows, cols, (((1,), (1,)), ((), ())),
                           preferred_element_type=jnp.float32)       # (TILE_R, S)
    rn = jnp.sum(rows * rows, axis=-1, keepdims=True)                # (TILE_R, 1)
    # Column norms as a (1, S) lane vector via a tiny MXU matmul -- avoids an
    # in-kernel XLU transpose of a sublane-oriented vector.
    cn = lax.dot_general(jnp.ones((1, d), jnp.float32), cols * cols,
                         (((1,), (1,)), ((), ())),
                         preferred_element_type=jnp.float32)         # (1, S)
    d2 = jnp.maximum(rn + cn - 2.0 * prod, 0.0)
    dist = jnp.sqrt(d2)                                              # (TILE_R, S)

    # Strictly-lower-triangular mask (global row > col) and hinge mask.
    row_ids = i * tile_r + lax.broadcasted_iota(jnp.int32, (tile_r, s), 0)
    col_ids = lax.broadcasted_iota(jnp.int32, (tile_r, s), 1)
    mask = (row_ids > col_ids) & (dist < jnp.float32(hinge))

    # Pure-VALU per-tile accumulation; the expensive reduce happens once below.
    acc_ref[...] += jnp.where(mask, dist, 0.0)

    is_last = ((g == pl.num_programs(0) - 1) &
               (i == pl.num_programs(1) - 1))

    @pl.when(is_last)
    def _():
        # Single final cross-sublane/cross-lane reduce; reduction == "sum".
        loss_ref[0, 0] = -jnp.sum(acc_ref[...])


def signature_hinge_repulsion(signatures, hinge, *, tile_rows=16, reduction="sum"):
    """Pallas-backed SignatureHingeRepulsion.forward.

    signatures: (G, S, D) -- per-graph concatenated latent signatures
                (native dtype; cast to f32 inside the kernel).
    hinge: python float.
    reduction: only "sum" (the module default) is implemented.
    Returns the scalar loss (f32).
    """
    if reduction != "sum":
        raise NotImplementedError("only reduction='sum' is implemented")
    G, S, D = signatures.shape
    assert tile_rows % 8 == 0, "row tile must be sublane-aligned"
    assert S % tile_rows == 0, "pad the signature count to a multiple of tile_rows"
    grid = (G, S // tile_rows)

    # Double-buffered tile budget (row tiles + column slab + f32 accumulator),
    # with padding headroom; clamp into the scoped-VMEM range safe on all chips.
    itemsize = jnp.dtype(signatures.dtype).itemsize
    vmem_bytes = 4 * (2 * tile_rows * max(D, 128) * itemsize
                      + 2 * S * max(D, 128) * itemsize
                      + tile_rows * max(S, 128) * 4)
    vmem_limit = int(min(max(vmem_bytes, 16 * 1024 * 1024), 32 * 1024 * 1024))

    kernel = functools.partial(_hinge_repulsion_kernel, hinge=float(hinge))

    loss = pl.pallas_call(
        kernel,
        out_shape=jax.ShapeDtypeStruct((1, 1), jnp.float32),
        grid_spec=pltpu.PrefetchScalarGridSpec(
            num_scalar_prefetch=0,
            grid=grid,
            in_specs=[
                # Row tile of the current graph's signatures.
                pl.BlockSpec((None, tile_rows, D), lambda g, i: (g, i, 0)),
                # Full signature slab of the current graph (matmul RHS).
                pl.BlockSpec((None, S, D), lambda g, i: (g, 0, 0)),
            ],
            out_specs=pl.BlockSpec((1, 1), lambda g, i: (0, 0),
                                   memory_space=pltpu.MemorySpace.SMEM),
            scratch_shapes=[pltpu.VMEM((tile_rows, S), jnp.float32)],
        ),
        compiler_params=pltpu.CompilerParams(
            dimension_semantics=("arbitrary", "arbitrary"),
            vmem_limit_bytes=vmem_limit,
        ),
    )(signatures, signatures)

    return loss[0, 0]


if __name__ == "__main__":
    key = jax.random.PRNGKey(0)

    # Model configuration implied by the module: 2 latent graphs, each with
    # 16 input + 16 mediator + 16 output latent signatures of dim 32.
    G, n_in, n_med, n_out, D = 2, 16, 16, 16, 32
    hinge = 8.0

    keys = jax.random.split(key, 3 * G)
    graphs = []
    for g in range(G):
        k_in, k_med, k_out = keys[3 * g], keys[3 * g + 1], keys[3 * g + 2]
        input_sigs = jax.random.normal(k_in, (n_in, D), dtype=jnp.float32)
        mediator_sigs = jax.random.normal(k_med, (n_med, D), dtype=jnp.float32)
        output_sigs = jax.random.normal(k_out, (n_out, D), dtype=jnp.float32)
        # extract_signatures: torch.cat([input, mediator, output], dim=0)
        graphs.append(jnp.concatenate([input_sigs, mediator_sigs, output_sigs], 0))
    signatures = jnp.stack(graphs, axis=0)              # (2, 48, 32)

    loss = signature_hinge_repulsion(signatures, hinge, tile_rows=16)
    jax.block_until_ready(loss)

    # Pure-JAX reference of SignatureHingeRepulsion.forward (reduction="sum").
    S = signatures.shape[1]
    tril = jnp.tril(jnp.ones((S, S), dtype=bool), k=-1)
    ref = jnp.float32(0.0)
    for g in range(G):
        x = signatures[g].astype(jnp.float32)
        prod = jnp.dot(x, x.T, precision=jax.lax.Precision.HIGHEST)
        sq = jnp.sum(x * x, axis=-1)
        d2 = jnp.maximum(sq[:, None] + sq[None, :] - 2.0 * prod, 0.0)
        dist = jnp.sqrt(d2)
        msk = tril & (dist < hinge)
        ref = ref - jnp.sum(jnp.where(msk, dist, 0.0))

    assert jnp.allclose(loss, ref, rtol=1e-4, atol=1e-2), (loss, ref)
    print("KERNEL_OK")
</pallas_src>

<mosaic_0001>
module attributes {stable_mosaic.version = 11 : i64} {
  func.func @_hinge_repulsion_kernel(%arg0: i32, %arg1: i32, %arg2: memref<1x16x32xf32, #tpu.memory_space<vmem>>, %arg3: memref<1x48x32xf32, #tpu.memory_space<vmem>>, %arg4: memref<1x1xf32, #tpu.memory_space<smem>>, %arg5: memref<16x48xf32, #tpu.memory_space<vmem>>) attributes {dimension_semantics = [#tpu.dimension_semantics<arbitrary>, #tpu.dimension_semantics<arbitrary>], iteration_bounds = array<i64: 2, 3>, scalar_prefetch = 0 : i64, scratch_operands = 1 : i64, tpu.core_type = #tpu.core_type<tc>, window_params = [{transform_indices = @transform_0, window_bounds = array<i64: 1, 16, 32>}, {transform_indices = @transform_1, window_bounds = array<i64: 1, 48, 32>}, {transform_indices = @transform_2, window_bounds = array<i64: 1, 1>}]} {
    %c0_i32 = arith.constant 0 : i32
    %0 = arith.cmpi eq, %arg0, %c0_i32 : i32
    %c0_i32_0 = arith.constant 0 : i32
    %1 = arith.cmpi eq, %arg1, %c0_i32_0 : i32
    %2 = arith.andi %0, %1 : i1
    %3 = arith.extui %2 : i1 to i32
    %c0_i32_1 = arith.constant 0 : i32
    %4 = arith.cmpi ne, %3, %c0_i32_1 : i32
    scf.if %4 {
      %cst_19 = arith.constant 0.000000e+00 : f32
      %44 = vector.broadcast %cst_19 : f32 to vector<16x48xf32>
      %c0_20 = arith.constant 0 : index
      %c0_21 = arith.constant 0 : index
      %45 = vector.load %arg5[%c0_20, %c0_21] : memref<16x48xf32, #tpu.memory_space<vmem>>, vector<16x48xf32>
      tpu.vector_store %arg5[%c0_20, %c0_21], %44 {strides = array<i32>} : memref<16x48xf32, #tpu.memory_space<vmem>>, vector<16x48xf32>,
    } else {
    }
    %c0 = arith.constant 0 : index
    %c0_2 = arith.constant 0 : index
    %c0_3 = arith.constant 0 : index
    %5 = vector.load %arg2[%c0, %c0_2, %c0_3] : memref<1x16x32xf32, #tpu.memory_space<vmem>>, vector<1x16x32xf32>
    %6 = vector.shape_cast %5 : vector<1x16x32xf32> to vector<16x32xf32>
    %c0_4 = arith.constant 0 : index
    %c0_5 = arith.constant 0 : index
    %c0_6 = arith.constant 0 : index
    %7 = vector.load %arg3[%c0_4, %c0_5, %c0_6] : memref<1x48x32xf32, #tpu.memory_space<vmem>>, vector<1x48x32xf32>
    %8 = vector.shape_cast %7 : vector<1x48x32xf32> to vector<48x32xf32>
    %cst = arith.constant dense<0.000000e+00> : vector<16x48xf32>
    %9 = tpu.matmul %6, %8, %cst {dimension_numbers = #tpu.dot_dimension_numbers<[1], [1], [0], [0], [0, 0, 1, 0], [], []>} : vector<16x32xf32>, vector<48x32xf32>, vector<16x48xf32> -> vector<16x48xf32>
    %10 = arith.mulf %6, %6 : vector<16x32xf32>
    %cst_7 = arith.constant dense<0.000000e+00> : vector<16xf32>
    %11 = vector.multi_reduction <add>, %10, %cst_7 [1] : vector<16x32xf32> to vector<16xf32>
    %12 = vector.shape_cast %11 : vector<16xf32> to vector<16x1xf32>
    %cst_8 = arith.constant 1.000000e+00 : f32
    %13 = vector.broadcast %cst_8 : f32 to vector<1x32xf32>
    %14 = arith.mulf %8, %8 : vector<48x32xf32>
    %cst_9 = arith.constant dense<0.000000e+00> : vector<1x48xf32>
    %15 = tpu.matmul %13, %14, %cst_9 {dimension_numbers = #tpu.dot_dimension_numbers<[1], [1], [0], [0], [0, 0, 1, 0], [], []>} : vector<1x32xf32>, vector<48x32xf32>, vector<1x48xf32> -> vector<1x48xf32>
    %16 = vector.broadcast %12 : vector<16x1xf32> to vector<16x48xf32>
    %17 = vector.broadcast %15 : vector<1x48xf32> to vector<16x48xf32>
    %18 = arith.addf %16, %17 : vector<16x48xf32>
    %cst_10 = arith.constant 2.000000e+00 : f32
    %19 = vector.broadcast %cst_10 : f32 to vector<16x48xf32>
    %20 = arith.mulf %19, %9 : vector<16x48xf32>
    %21 = arith.subf %18, %20 : vector<16x48xf32>
    %cst_11 = arith.constant 0.000000e+00 : f32
    %22 = vector.broadcast %cst_11 : f32 to vector<16x48xf32>
    %23 = arith.maximumf %21, %22 : vector<16x48xf32>
    %24 = math.sqrt %23 : vector<16x48xf32>
    %c16_i32 = arith.constant 16 : i32
    %25 = arith.muli %arg1, %c16_i32 : i32
    %26 = tpu.iota {dimensions = array<i32: 0>} : vector<16x48xi32>
    %27 = vector.broadcast %25 : i32 to vector<16x48xi32>
    %28 = arith.addi %27, %26 : vector<16x48xi32>
    %29 = tpu.iota {dimensions = array<i32: 1>} : vector<16x48xi32>
    %30 = arith.cmpi sgt, %28, %29 : vector<16x48xi32>
    %cst_12 = arith.constant 8.000000e+00 : f32
    %31 = vector.broadcast %cst_12 : f32 to vector<16x48xf32>
    %32 = arith.cmpf olt, %24, %31 : vector<16x48xf32>
    %33 = arith.andi %30, %32 : vector<16x48xi1>
    %c0_13 = arith.constant 0 : index
    %c0_14 = arith.constant 0 : index
    %34 = vector.load %arg5[%c0_13, %c0_14] : memref<16x48xf32, #tpu.memory_space<vmem>>, vector<16x48xf32>
    %cst_15 = arith.constant 0.000000e+00 : f32
    %35 = vector.broadcast %cst_15 : f32 to vector<16x48xf32>
    %36 = arith.select %33, %24, %35 : vector<16x48xi1>, vector<16x48xf32>
    %37 = arith.addf %34, %36 : vector<16x48xf32>
    %c0_16 = arith.constant 0 : index
    %c0_17 = arith.constant 0 : index
    %38 = vector.load %arg5[%c0_16, %c0_17] : memref<16x48xf32, #tpu.memory_space<vmem>>, vector<16x48xf32>
    tpu.vector_store %arg5[%c0_16, %c0_17], %37 {strides = array<i32>} : memref<16x48xf32, #tpu.memory_space<vmem>>, vector<16x48xf32>,
    %c1_i32 = arith.constant 1 : i32
    %39 = arith.cmpi eq, %arg0, %c1_i32 : i32
    %c2_i32 = arith.constant 2 : i32
    %40 = arith.cmpi eq, %arg1, %c2_i32 : i32
    %41 = arith.andi %39, %40 : i1
    %42 = arith.extui %41 : i1 to i32
    %c0_i32_18 = arith.constant 0 : i32
    %43 = arith.cmpi ne, %42, %c0_i32_18 : i32
    scf.if %43 {
      %c0_19 = arith.constant 0 : index
      %c0_20 = arith.constant 0 : index
      %44 = vector.load %arg5[%c0_19, %c0_20] : memref<16x48xf32, #tpu.memory_space<vmem>>, vector<16x48xf32>
      %45 = vector.shape_cast %44 : vector<16x48xf32> to vector<1x16x48xf32>
      %cst_21 = arith.constant dense<0.000000e+00> : vector<1xf32>
      %46 = vector.multi_reduction <add>, %45, %cst_21 [1, 2] : vector<1x16x48xf32> to vector<1xf32>
      %47 = vector.shape_cast %46 : vector<1xf32> to vector<1x1x1xf32>
      %48 = vector.extract %47[0, 0, 0] : f32 from vector<1x1x1xf32>
      %cst_22 = arith.constant 0.000000e+00 : f32
      %49 = arith.subf %cst_22, %48 : f32
      %c0_23 = arith.constant 0 : index
      %c0_24 = arith.constant 0 : index
      %50 = memref.load %arg4[%c0_23, %c0_24] : memref<1x1xf32, #tpu.memory_space<smem>>
      memref.store %49, %arg4[%c0_23, %c0_24] : memref<1x1xf32, #tpu.memory_space<smem>>
    } else {
    }
    return
  }
  func.func @transform_0(%arg0: i32, %arg1: i32) -> (i32, i32, i32) {
    %c0_i32 = arith.constant 0 : i32
    %c0_i32_0 = arith.constant 0 : i32
    return %arg0, %arg1, %c0_i32 : i32, i32, i32
  }
  func.func @transform_1(%arg0: i32, %arg1: i32) -> (i32, i32, i32) {
    %c0_i32 = arith.constant 0 : i32
    %c0_i32_0 = arith.constant 0 : i32
    %c0_i32_1 = arith.constant 0 : i32
    return %arg0, %c0_i32, %c0_i32_0 : i32, i32, i32
  }
  func.func @transform_2(%arg0: i32, %arg1: i32) -> (i32, i32) {
    %c0_i32 = arith.constant 0 : i32
    %c0_i32_0 = arith.constant 0 : i32
    %c0_i32_1 = arith.constant 0 : i32
    return %c0_i32, %c0_i32_0 : i32, i32
  }
}

</mosaic_0001>

<llo_original>
// kernel: tpu_custom_call.1
$region0: #{tpu_custom_call.1}
  #allocation0 [shape = 'u32[]', space=smem, size = 0x4, offset = 0x4, fixed_abs, tag = 'smem constant byte address 0x4 - core index']
  #allocation1 [shape = 'u32[72,128]{1,0:T(1,128)}', space=vmem, size = 0x9000, scoped, tag = 'internal scratch']
  #allocation2 [shape = 'f32[16,48]{1,0:T(8,128)}', space=vmem, size = 0x2000, scoped, tag = 'scratch operand']
  %s0 = inlined_call_operand.vmem [shape: f32[2,48,32], index: 0, kind: input, shape index: {}]
  %s1 = inlined_call_operand.vmem [shape: f32[2,48,32], index: 1, kind: input, shape index: {}]
  %s2 = inlined_call_operand.hbm [shape: f32[1,1], index: 2, kind: output, shape index: {}]
  %s3 = sld [smem:[#allocation0]]
  $region49: #{tpu_custom_call.1} parent=0
    _
  %s5 = ssub.s32 1, %s3
  %s6 = scalar_select 0, %s5, %s3
  $region1: #{tpu_custom_call.1} parent=0
    #allocation3 [shape = 'u8[512]{0}', space=smem, size = 0x200, scoped, tag = 'output window, operand 0, single buffered']
    #allocation4 [shape = 's32[2]{0}', space=sflag, size = 0x8, scoped, tag = 'scoped memory for tpu_custom_call.1']
    %7 = vsyncpa [#allocation4], 0
    loop: start=0, step=1, limit=8
    $region2: #{tpu_custom_call.1} parent=1 // loop_pre_header
      _
    $region3: #{tpu_custom_call.1} parent=1 // loop_header
      %s9 = sphi 0, %s13
      %p10 = scmp.ge.s32.totalorder %s9, 8
      %s16 = sphi 0, %s28
      %s17 = sphi 0, %s24
      %s18 = sphi 0, %s16
      %s19 = sphi 0, %s17
      %s20 = sphi 0, %s18
      %s21 = sphi 0, %s19
      %s33 = sphi 0, %s35
      %s36 = sphi 0, %s33
      %s37 = sphi 0, %s36
      %s53 = sphi 0, %s37
      %s59 = sphi 0, %s61
      %s62 = sphi 0, %s59
      %s63 = sphi 0, %s62
      %s79 = sphi 0, %s63
      %s83 = sphi 0, %s83
      %s85 = sphi 0, %s83
      %s86 = sphi 0, %s85
      %s100 = sphi 0, %s86
    $region4: #{tpu_custom_call.1} parent=1 // loop_header_branch
      %12 = sbr.rel (%p10) target = $region8
    $region5: #{tpu_custom_call.1} parent=1 // loop_body
      %s14 = ssub.s32 %s9, 1
      %s15 = ssub.s32 %s9, 2
      %s22 = sadd.s32 1, %s17
      %p23 = scmp.ge.s32.totalorder %s22, 3
      %s24 = scalar_select %p23, 0, %s22
      %s25 = sadd.s32 1, %s16
      %s26 = scalar_select %p23, %s25, %s16
      %p27 = scmp.ge.s32.totalorder %s26, 2
      %s28 = scalar_select %p27, 0, %s26
      %s29 = ssub.s32 %s16, %s28
      %s30 = ssub.s32 %s17, %s24
      %s31 = sor.u32 %s29, %s30
      %p32 = scmp.eq.s32.totalorder %s31, 0
      %s34 = sadd.s32 %s33, 1
      %s35 = scalar_select %p32, %s33, %s34
      %p38 = pneg %p32
      %p39 = scmp.eq.s32.totalorder %s9, 5
      %p40 = por %p38, %p39
      %p41 = scmp.ne.s32.totalorder %s33, %s36
      %p42 = scmp.eq.s32.totalorder %s9, 0
      %p43 = por %p41, %p42
      %p44 = scmp.ne.s32.totalorder %s33, %s36
      %p45 = scmp.eq.s32.totalorder %s14, 5
      %p46 = por %p44, %p45
      %p47 = scmp.ne.s32.totalorder %s36, %s37
      %p48 = scmp.eq.s32.totalorder %s14, 0
      %p49 = por %p47, %p48
      %p50 = scmp.ne.s32.totalorder %s36, %s37
      %p51 = scmp.eq.s32.totalorder %s15, 5
      %p52 = por %p50, %p51
      %p54 = scmp.ne.s32.totalorder %s37, %s53
      %p55 = scmp.eq.s32.totalorder %s15, 0
      %p56 = por %p54, %p55
      %s57 = ssub.s32 %s16, %s28
      %p58 = scmp.eq.s32.totalorder %s57, 0
      %s60 = sadd.s32 %s59, 1
      %s61 = scalar_select %p58, %s59, %s60
      %p64 = pneg %p58
      %p65 = scmp.eq.s32.totalorder %s9, 5
      %p66 = por %p64, %p65
      %p67 = scmp.ne.s32.totalorder %s59, %s62
      %p68 = scmp.eq.s32.totalorder %s9, 0
      %p69 = por %p67, %p68
      %p70 = scmp.ne.s32.totalorder %s59, %s62
      %p71 = scmp.eq.s32.totalorder %s14, 5
      %p72 = por %p70, %p71
      %p73 = scmp.ne.s32.totalorder %s62, %s63
      %p74 = scmp.eq.s32.totalorder %s14, 0
      %p75 = por %p73, %p74
      %p76 = scmp.ne.s32.totalorder %s62, %s63
      %p77 = scmp.eq.s32.totalorder %s15, 5
      %p78 = por %p76, %p77
      %p80 = scmp.ne.s32.totalorder %s63, %s79
      %p81 = scmp.eq.s32.totalorder %s15, 0
      %p82 = por %p80, %p81
      %s84 = sadd.s32 %s83, 1
      %p87 = scmp.eq.s32.totalorder %s9, 5
      %p88 = scmp.ne.s32.totalorder %s83, %s85
      %p89 = scmp.eq.s32.totalorder %s9, 0
      %p90 = por %p88, %p89
      %p91 = scmp.ne.s32.totalorder %s83, %s85
      %p92 = scmp.eq.s32.totalorder %s14, 5
      %p93 = por %p91, %p92
      %p94 = scmp.ne.s32.totalorder %s85, %s86
      %p95 = scmp.eq.s32.totalorder %s14, 0
      %p96 = por %p94, %p95
      %p97 = scmp.ne.s32.totalorder %s85, %s86
      %p98 = scmp.eq.s32.totalorder %s15, 5
      %p99 = por %p97, %p98
      %p101 = scmp.ne.s32.totalorder %s86, %s100
      %p102 = scmp.eq.s32.totalorder %s15, 0
      %p103 = por %p101, %p102
      %p104 = scmp.le.s32.totalorder 1, %s9
      %p105 = scmp.lt.s32.totalorder %s9, 7
      %p106 = pnand %p104, %p105
      %p107 = pneg %p106
      // Predicated region
      $region9: #{tpu_custom_call.1} parent=5 // pred_check
        _
      $region10: #{tpu_custom_call.1} parent=5 // pred_check_branch
        %109 = sbr.rel (%p106) target = $region12
      $region11: #{tpu_custom_call.1} parent=5 // pred_region
        %s110 = ssub.s32 %s9, 1
      $region12: #{tpu_custom_call.1} parent=5 // pred_fallthru
        _
      %p111 = scmp.lt.s32.totalorder %s9, 6
      // Predicated region
      $region13: #{tpu_custom_call.1} parent=5 // pred_check
        %p112 = pneg %p111
      $region14: #{tpu_custom_call.1} parent=5 // pred_check_branch
        %114 = sbr.rel (%p112) target = $region16
      $region15: #{tpu_custom_call.1} parent=5 // pred_region
        // Predicated region
        $region17: #{tpu_custom_call.1} parent=15 // pred_check
          %p115 = pneg %p43
        $region18: #{tpu_custom_call.1} parent=15 // pred_check_branch
          %117 = sbr.rel (%p115) target = $region20
        $region19: #{tpu_custom_call.1} parent=15 // pred_region
          %s118 = smul.u32 2, %s17
          %p119 = scmp.lt.s32.totalorder %s16, 1
          %s120 = scalar_select %p119, %s16, 1
          %p121 = scmp.lt.s32.totalorder %s118, 5
          %s122 = scalar_select %p121, %s118, 5
          %s123 = smul.addr %s120, 6
          %s124 = sadd.s32 %s122, %s123
          %s125 = smul.addr %s124, 8
          %s126 = scalar_lea.vmem %s0, %s125
          %s127 = smul.u32 2, %s17
        $region20: #{tpu_custom_call.1} parent=15 // pred_fallthru
          _
        // Predicated region
        $region21: #{tpu_custom_call.1} parent=15 // pred_check
          %p128 = pneg %p69
        $region22: #{tpu_custom_call.1} parent=15 // pred_check_branch
          %130 = sbr.rel (%p128) target = $region24
        $region23: #{tpu_custom_call.1} parent=15 // pred_region
          %p131 = scmp.lt.s32.totalorder %s16, 1
          %s132 = scalar_select %p131, %s16, 1
          %s133 = smul.addr %s132, 6
          %s134 = smul.addr %s133, 8
          %s135 = scalar_lea.vmem %s1, %s134
        $region24: #{tpu_custom_call.1} parent=15 // pred_fallthru
          _
      $region16: #{tpu_custom_call.1} parent=5 // pred_fallthru
        _
      %p136 = scmp.le.s32.totalorder 1, %s9
      %p137 = scmp.lt.s32.totalorder %s9, 7
      %p138 = pnand %p136, %p137
      %p139 = pneg %p138
      // Predicated region
      $region25: #{tpu_custom_call.1} parent=5 // pred_check
        _
      $region26: #{tpu_custom_call.1} parent=5 // pred_check_branch
        %141 = sbr.rel (%p138) target = $region28
      $region27: #{tpu_custom_call.1} parent=5 // pred_region
        %s142 = ssub.s32 %s9, 1
        %s143 = smul.u32 2, %s19
        %p144 = scmp.lt.s32.totalorder %s18, 1
        %s145 = scalar_select %p144, %s18, 1
        %p146 = scmp.lt.s32.totalorder %s143, 5
        %s147 = scalar_select %p146, %s143, 5
        %s148 = smul.addr %s145, 6
        %s149 = sadd.s32 %s147, %s148
        %s150 = smul.addr %s149, 8
        %s151 = scalar_lea.vmem %s0, %s150
        %p152 = pneg %p49
        %p153 = pneg %p46
        %p154 = scmp.lt.s32.totalorder %s18, 1
        %s155 = scalar_select %p154, %s18, 1
        %s156 = smul.addr %s155, 6
        %s157 = smul.addr %s156, 8
        %s158 = scalar_lea.vmem %s1, %s157
        %p159 = pneg %p75
        %p160 = pneg %p72
        %p161 = pneg %p96
        %p162 = pneg %p93
        %s163 = smul.u32 2, %s19
        %p164 = scmp.lt.s32.totalorder %s18, 1
        %s165 = scalar_select %p164, %s18, 1
        %p166 = scmp.lt.s32.totalorder %s163, 5
        %s167 = scalar_select %p166, %s163, 5
        %s168 = smul.addr %s165, 6
        %s169 = sadd.s32 %s167, %s168
        %s170 = smul.addr %s169, 8
        %s171 = scalar_lea.vmem %s0, %s170
        %s172 = smul.u32 2, %s19
        %p173 = scmp.lt.s32.totalorder %s18, 1
        %s174 = scalar_select %p173, %s18, 1
        %s175 = smul.addr %s174, 6
        %s176 = smul.addr %s175, 8
        %s177 = scalar_lea.vmem %s1, %s176
        %p178 = scmp.eq.s32.totalorder %s18, 0
        %p179 = scmp.eq.s32.totalorder %s19, 0
        %p180 = pnand %p178, %p179
        %p181 = pneg %p180
        // Predicated region
        $region29: #{tpu_custom_call.1} parent=27 // pred_check
          _
        $region30: #{tpu_custom_call.1} parent=27 // pred_check_branch
          %183 = sbr.rel (%p180) target = $region32
        $region31: #{tpu_custom_call.1} parent=27 // pred_region
          %vm184 = vcmask 392192
          %185 = vst.msk [vmem:[#allocation2] sm:$0xff] %vm184, 0.0
          %186 = vst.msk [vmem:[#allocation2 + $0x8] sm:$0xff] %vm184, 0.0
        $region32: #{tpu_custom_call.1} parent=27 // pred_fallthru
          _
        %v187 = vld [vmem:[%s171] sm:$0xff]
        %v188 = vld [vmem:[%s171 + $0x8] sm:$0xff]
        %v189 = vld [vmem:[%s177] sm:$0xff]
        %v190 = vld [vmem:[%s177 + $0x8] sm:$0xff]
        %v191 = vld [vmem:[%s177 + $0x10] sm:$0xff]
        %v192 = vld [vmem:[%s177 + $0x18] sm:$0xff]
        %v193 = vld [vmem:[%s177 + $0x20] sm:$0xff]
        %v194 = vld [vmem:[%s177 + $0x28] sm:$0xff]
        %vm195 = vcmask 261120
        %v197 = vsel %vm195, %v187, 0
        %v200 = vsel %vm195, %v188, 0
        %v203 = vsel %vm195, %v189, 0
        %v206 = vsel %vm195, %v190, 0
        %v209 = vsel %vm195, %v191, 0
        %v212 = vsel %vm195, %v192, 0
        %v215 = vsel %vm195, %v193, 0
        %v218 = vsel %vm195, %v194, 0
        %220 = vmatpush.xpose.msra.mxu0 0.0
        %221 = vmatpush.xpose.msra.mxu0 0.0
        %222 = vmatpush.xpose.msra.mxu0 0.0
        %223 = vmatpush.xpose.msra.mxu0 0.0
        %224 = vmatpush.xpose.msra.mxu0 0.0
        %225 = vmatpush.xpose.msra.mxu0 0.0
        %226 = vmatpush.xpose.msra.mxu0 0.0
        %227 = vmatpush.xpose.msra.mxu0 0.0
        %228 = vmatpush.xpose.msra.mxu0 0.0
        %229 = vmatpush.xpose.msra.mxu0 0.0
        %230 = vmatpush.xpose.msra.mxu0 %v218
        %231 = vmatpush.xpose.msra.mxu0 %v215
        %232 = vmatpush.xpose.msra.mxu0 %v212
        %233 = vmatpush.xpose.msra.mxu0 %v209
        %234 = vmatpush.xpose.msra.mxu0 %v206
        %235 = vmatpush.xpose.msra.mxu0 %v203
        %236 = vmatmul.f32.gmra.mxu0 %v197
        %v237 = vpop.f32.mrf.mxu0
        %v238 = vadd.f32 0.0, %v237
        %239 = vmatmul.f32.gmra.mxu0 %v200
        %v240 = vpop.f32.mrf.mxu0
        %v241 = vadd.f32 0.0, %v240
        %242 = vdwg.mxu0
        %v243 = vmul.f32 %v187, %v187
        %v244 = vmul.f32 %v188, %v188
        %v245 = vsel %vm195, %v243, 0.0
        %246 = vadd.xlane.f32.xlu0 %v245
        %v247 = vpop.xlane.xlu0 %246
        %v248 = vsel %vm195, %v244, 0.0
        %249 = vadd.xlane.f32.xlu0 %v248
        %v250 = vpop.xlane.xlu0 %249
        %v251 = vmul.f32 %v189, %v189
        %v252 = vmul.f32 %v190, %v190
        %v253 = vmul.f32 %v191, %v191
        %v254 = vmul.f32 %v192, %v192
        %v255 = vmul.f32 %v193, %v193
        %v256 = vmul.f32 %v194, %v194
        %v258 = vsel %vm195, 1.0, 0
        %v261 = vsel %vm195, %v251, 0
        %v264 = vsel %vm195, %v252, 0
        %v267 = vsel %vm195, %v253, 0
        %v270 = vsel %vm195, %v254, 0
        %v273 = vsel %vm195, %v255, 0
        %v276 = vsel %vm195, %v256, 0
        %278 = vmatpush.xpose.msra.mxu0 0.0
        %279 = vmatpush.xpose.msra.mxu0 0.0
        %280 = vmatpush.xpose.msra.mxu0 0.0
        %281 = vmatpush.xpose.msra.mxu0 0.0
        %282 = vmatpush.xpose.msra.mxu0 0.0
        %283 = vmatpush.xpose.msra.mxu0 0.0
        %284 = vmatpush.xpose.msra.mxu0 0.0
        %285 = vmatpush.xpose.msra.mxu0 0.0
        %286 = vmatpush.xpose.msra.mxu0 0.0
        %287 = vmatpush.xpose.msra.mxu0 0.0
        %288 = vmatpush.xpose.msra.mxu0 %v276
        %289 = vmatpush.xpose.msra.mxu0 %v273
        %290 = vmatpush.xpose.msra.mxu0 %v270
        %291 = vmatpush.xpose.msra.mxu0 %v267
        %292 = vmatpush.xpose.msra.mxu0 %v264
        %293 = vmatpush.xpose.msra.mxu0 %v261
        %294 = vmatmul.f32.gmra.mxu0 %v258
        %v295 = vpop.f32.mrf.mxu0
        %v296 = vadd.f32 0.0, %v295
        %297 = vdwg.mxu0
        %v298 = vperm.slane %v296, 0
        %v299 = vadd.f32 %v247, %v298
        %v300 = vadd.f32 %v250, %v298
        %v301 = vmul.f32 %v238, 2.0
        %v302 = vmul.f32 %v241, 2.0
        %v303 = vsub.f32 %v299, %v301
        %v304 = vsub.f32 %v300, %v302
        %v305 = vmax.f32 %v303, 0.0
        %v306 = vmax.f32 %v304, 0.0
        %v307 = vrsqrt.pop %v305
        %v308 = vmul.f32 %v307, %v305
        %v309 = vmul.f32 %v308, %v307
        %v310 = vmul.f32 0.5, %v309
        %v311 = vsub.f32 1.5, %v310
        %v312 = vmul.f32 %v307, %v311
        %v313 = vmul.f32 %v305, %v312
        %vm314 = vcmp.eq.f32.partialorder %v305, inf
        %v315 = vsel %vm314, %v305, %v313
        %vm316 = vcmp.eq.f32.partialorder %v305, 0.0
        %v317 = vand.u32 %v305, 2147483648
        %v318 = vsel %vm316, %v317, %v315
        %v319 = vrsqrt.pop %v306
        %v320 = vmul.f32 %v319, %v306
        %v321 = vmul.f32 %v320, %v319
        %v322 = vmul.f32 0.5, %v321
        %v323 = vsub.f32 1.5, %v322
        %v324 = vmul.f32 %v319, %v323
        %v325 = vmul.f32 %v306, %v324
        %vm326 = vcmp.eq.f32.partialorder %v306, inf
        %v327 = vsel %vm326, %v306, %v325
        %vm328 = vcmp.eq.f32.partialorder %v306, 0.0
        %v329 = vand.u32 %v306, 2147483648
        %v330 = vsel %vm328, %v329, %v327
        %s331 = smul.u32 %s19, 16
        %v332 = vlaneseq
        %v333 = vshrl.u32 %v332, 7
        %v334 = vadd.s32 %v333, 8
        %v335 = vstv %s331
        %v336 = vadd.s32 %v335, %v333
        %v337 = vadd.s32 %v335, %v334
        %v338 = vlaneseq
        %v339 = vand.u32 %v338, 127
        %vm340 = vcmp.gt.s32.totalorder %v336, %v339
        %vm341 = vcmp.gt.s32.totalorder %v337, %v339
        %vm342 = vcmp.lt.f32.partialorder %v318, 8.0
        %vm343 = vcmp.lt.f32.partialorder %v330, 8.0
        %vm344 = vmand %vm340, %vm342
        %vm345 = vmand %vm341, %vm343
        %v346 = vld [vmem:[#allocation2] sm:$0xff]
        %v347 = vld [vmem:[#allocation2 + $0x8] sm:$0xff]
        %v348 = vsel %vm344, %v318, 0.0
        %v349 = vsel %vm345, %v330, 0.0
        %v350 = vadd.f32 %v346, %v348
        %v351 = vadd.f32 %v347, %v349
        %vm352 = vcmask 392192
        %353 = vst.msk [vmem:[#allocation2] sm:$0xff] %vm352, %v350
        %354 = vst.msk [vmem:[#allocation2 + $0x8] sm:$0xff] %vm352, %v351
        %p355 = scmp.eq.s32.totalorder %s18, 1
        %p356 = scmp.eq.s32.totalorder %s19, 2
        %p357 = pnand %p355, %p356
        %p358 = pneg %p357
        // Predicated region
        $region33: #{tpu_custom_call.1} parent=27 // pred_check
          _
        $region34: #{tpu_custom_call.1} parent=27 // pred_check_branch
          %360 = sbr.rel (%p357) target = $region36
        $region35: #{tpu_custom_call.1} parent=27 // pred_region
          %v361 = vld [vmem:[#allocation2] sm:$0xff]
          %v362 = vld [vmem:[#allocation2 + $0x8] sm:$0xff]
          %v363 = vsel %vm352, %v361, 0.0
          %v364 = vsel %vm352, %v362, 0.0
          %v365 = vadd.f32 %v363, %v364
          %366 = vadd.xlane.f32.xlu0 %v365
          %v367 = vpop.xlane.xlu0 %366
          %v368 = vrot.slane %v367, 4
          %v369 = vadd.f32 %v367, %v368
          %v370 = vrot.slane %v369, 2
          %v371 = vadd.f32 %v369, %v370
          %v372 = vrot.slane %v371, 1
          %v373 = vadd.f32 %v371, %v372
          %s374 = vtos %v373
          %s375 = ssub.f32 0.0, %s374
          %s376 = scalar_lea.smem [#allocation3], 0
          %377 = sst [smem:[%s376]] %s375
        $region36: #{tpu_custom_call.1} parent=27 // pred_fallthru
          _
        // Predicated region
        $region37: #{tpu_custom_call.1} parent=27 // pred_check
          %p378 = pneg %p93
        $region38: #{tpu_custom_call.1} parent=27 // pred_check_branch
          %380 = sbr.rel (%p378) target = $region40
        $region39: #{tpu_custom_call.1} parent=27 // pred_region
          %382 = vsyncadd [#allocation4], 0
          %s384 = sshll.u32 %s2, 4
          %s385 = int_to_ptr.hbm [resolvable:$true] %s384
          %387 = dma.smem_to_hbm [#allocation3], 16, %s385, [#allocation4]
        $region40: #{tpu_custom_call.1} parent=27 // pred_fallthru
          _
        // Predicated region
        $region41: #{tpu_custom_call.1} parent=27 // pred_check
          %p388 = pneg %p93
        $region42: #{tpu_custom_call.1} parent=27 // pred_check_branch
          %390 = sbr.rel (%p388) target = $region44
        $region43: #{tpu_custom_call.1} parent=27 // pred_region
          %392 = dma.done [#allocation4], 16
        $region44: #{tpu_custom_call.1} parent=27 // pred_fallthru
          _
        %393 = sfence
      $region28: #{tpu_custom_call.1} parent=5 // pred_fallthru
        _
      %p394 = scmp.le.s32.totalorder 2, %s9
      // Predicated region
      $region45: #{tpu_custom_call.1} parent=5 // pred_check
        %p395 = pneg %p394
      $region46: #{tpu_custom_call.1} parent=5 // pred_check_branch
        %397 = sbr.rel (%p395) target = $region48
      $region47: #{tpu_custom_call.1} parent=5 // pred_region
        %s398 = ssub.s32 %s9, 2
      $region48: #{tpu_custom_call.1} parent=5 // pred_fallthru
        _
    $region6: #{tpu_custom_call.1} parent=1 // loop_footer
      %s13 = sadd.s32 1, %s9
    $region7: #{tpu_custom_call.1} parent=1 // loop_footer_branch
      %8 = sbr.rel target = $region3
    $region8: #{tpu_custom_call.1} parent=1 // loop_exit
      _
    %399 = vsyncpa [#allocation4], 1
    %s400 = scalar_lea.sflag [#allocation4], 1
    %401 = vsyncpa %s400, 1

</llo_original>
